<compile_context>
chip_gen: v5e
topology: v5e:2x2
jax: 0.10.0
libtpu: 0.0.40
codegen_flags: <defaults>
</compile_context>

<pallas_src>
import numpy as np

import jax
import jax.numpy as jnp
from jax import lax
from jax.experimental import pallas as pl
from jax.experimental.pallas import tpu as pltpu


# ----------------------------------------------------------------------------
# Shared per-layer math (used by both kernels)
# ----------------------------------------------------------------------------
def _silu(z):
    return z * jax.nn.sigmoid(z)


def _ln_spatial(x, alpha, beta, eps=1e-5):
    """LayerNorm over the last (D) axis; alpha/beta broadcastable as (1, D)."""
    # One-pass stats: mean and E[x^2] are independent reductions, so both
    # cross-lane XLU reductions can issue back-to-back (kept in f32, eps kept).
    mean = jnp.mean(x, axis=-1, keepdims=True)
    msq = jnp.mean(x * x, axis=-1, keepdims=True)
    var = msq - mean * mean
    # rsqrt goes to the EUP slot (nearly free next to the VALU-heavy LN/SiLU).
    return (x - mean) * lax.rsqrt(var + eps) * alpha + beta


def _mlp_layer(x, emb, alpha1, beta1, w_conv, b_conv, alpha2, beta2,
               w_lin_t, b_lin):
    """One MLPblock on an activation tile x: (bt, S, D) f32."""
    bt, s, d = x.shape
    x = x + emb                                        # (bt,S,D) + (bt,1,D)

    # ---- block1: LN_spatial -> Conv1d(seq, seq, 1) -> SiLU -> residual ----
    y = _ln_spatial(x, alpha1, beta1)
    # Batched matmul over the seq axis.  Mosaic's dot_general needs matched
    # batch dims, so the shared (S,S) weight is broadcast to (bt,S,S); it is
    # tiny and loop-invariant within the layer.
    wc = jnp.broadcast_to(w_conv, (bt, s, s))
    y = lax.dot_general(wc, y, (((2,), (1,)), ((0,), (0,))),
                        preferred_element_type=jnp.float32)
    y = y + b_conv                                     # (bt,S,D) + (S,1)
    x = x + _silu(y)

    # ---- block2: LN_spatial -> Linear(dim, dim) -> SiLU -> residual ----
    y = _ln_spatial(x, alpha2, beta2)
    # Weight pre-transposed in the wrapper: (bt*S, D) @ (D, D), no in-kernel .T
    y = jnp.dot(y.reshape(bt * s, d), w_lin_t,
                preferred_element_type=jnp.float32).reshape(bt, s, d)
    y = y + b_lin                                      # (bt,S,D) + (1,D)
    x = x + _silu(y)
    return x


def _unpack_small(sp):
    """sp: (8, D) packed rows -> (alpha1, beta1, alpha2, beta2, b_lin)."""
    return sp[0:1, :], sp[1:2, :], sp[2:3, :], sp[3:4, :], sp[4:5, :]


# ----------------------------------------------------------------------------
# Kernels
# ----------------------------------------------------------------------------
def fused_all_layers_kernel(x_ref, emb_ref, wc_ref, bc_ref, wl_ref, sp_ref,
                            o_ref):
    """Fast path: grid = (batch_tiles,).  All layer weights are VMEM-resident
    (constant index_map -> fetched once); the layer loop is unrolled
    statically so the LLO scheduler sees the whole layer sweep."""
    x = x_ref[...].astype(jnp.float32)
    emb = emb_ref[...].astype(jnp.float32)
    for l in range(wc_ref.shape[0]):                  # static unroll over L
        a1, b1, a2, b2, bl = _unpack_small(sp_ref[l])
        x = _mlp_layer(x, emb, a1, b1, wc_ref[l], bc_ref[l],
                       a2, b2, wl_ref[l], bl)
    o_ref[...] = x.astype(o_ref.dtype)


def fused_layer_kernel(x_ref, emb_ref, wc_ref, bc_ref, wl_ref, sp_ref, o_ref):
    """Fallback: grid = (batch_tiles, num_layers).  o_ref holds the resident
    activation across the innermost ('arbitrary') layer axis, so the
    activation touches HBM only once per batch tile."""
    l = pl.program_id(1)

    @pl.when(l == 0)
    def _():
        o_ref[...] = x_ref[...]

    a1, b1, a2, b2, bl = _unpack_small(sp_ref[0])
    x = _mlp_layer(o_ref[...].astype(jnp.float32),
                   emb_ref[...].astype(jnp.float32),
                   a1, b1, wc_ref[0], bc_ref[0], a2, b2, wl_ref[0], bl)
    o_ref[...] = x.astype(o_ref.dtype)


# ----------------------------------------------------------------------------
# Generation-aware tiling
# ----------------------------------------------------------------------------
def _tpu_defaults():
    """(vmem_limit_bytes, tile_vmem_budget, target_mxu_rows, num_cores)."""
    kind = ""
    try:
        kind = jax.devices()[0].device_kind.lower()
    except Exception:
        pass
    if "v7" in kind:                      # 64 MiB VMEM, 256x256 MXU, 2 TCs
        return 48 << 20, 28 << 20, 256, 2
    if "v6" in kind:                      # 128 MiB VMEM, 256x256 MXU
        return 100 << 20, 64 << 20, 256, 1
    if "v5" in kind:                      # 128 MiB VMEM (v5e), 128x128 MXU
        return 96 << 20, 56 << 20, 128, 1
    return 48 << 20, 28 << 20, 128, 1     # unknown: v7x-safe conservative


def _padded_bytes(rows, cols, itemsize=4):
    """f32 bytes of a 2-D tile after (8,128) layout padding."""
    return (-(-rows // 8) * 8) * (-(-cols // 128) * 128) * itemsize


def _pick_batch_tile(batch, seq, dim, weight_bytes, tile_budget, target_rows,
                     num_cores):
    # Per-unit-of-bt VMEM: double-buffered x & out blocks + ~6 f32 temporaries.
    per_bt = 10 * _padded_bytes(seq, dim)
    avail = max(tile_budget - 2 * weight_bytes, per_bt)
    bt_vmem = max(1, avail // per_bt)
    bt_goal = max(1, -(-target_rows // seq))   # rows to fill the MXU (Linear)
    bt = int(min(batch, bt_vmem, 4 * bt_goal)) # up to 4x goal to cut grid steps
    if num_cores > 1 and batch >= num_cores:
        bt = min(bt, batch // num_cores)       # keep >= 1 batch tile per core
    bt = max(bt, 1)
    while batch % bt:
        bt -= 1
    return bt


# ----------------------------------------------------------------------------
# Wrappers
# ----------------------------------------------------------------------------
def run_trans_mlp_blocks(x, emb, params):
    """x: (B, S, D) f32, emb: (B, 1, D) f32; params: L-stacked weights."""
    B, S, D = x.shape
    L = params["w_conv"].shape[0]

    vmem_limit, tile_budget, target_rows, cores = _tpu_defaults()
    weight_bytes = L * (_padded_bytes(S, S) + _padded_bytes(S, 1)
                        + _padded_bytes(D, D) + _padded_bytes(8, D))
    bt = _pick_batch_tile(B, S, D, weight_bytes, tile_budget, target_rows,
                          cores)
    nb = B // bt

    cost = pl.CostEstimate(
        flops=L * B * (2 * S * S * D + 2 * S * D * D + 20 * S * D),
        transcendentals=L * B * S * (2 * D + 2),
        bytes_accessed=(2 * B * S * D + B * D) * 4 + 2 * weight_bytes)

    args = (x, emb, params["w_conv"], params["b_conv"], params["w_lin_t"],
            params["small"])

    use_fast = (L <= 16) and (2 * weight_bytes <= tile_budget // 2)

    if use_fast:
        full = lambda shape: pl.BlockSpec(shape, lambda b: (0, 0, 0))
        return pl.pallas_call(
            fused_all_layers_kernel,
            out_shape=jax.ShapeDtypeStruct((B, S, D), x.dtype),
            grid=(nb,),
            in_specs=[
                pl.BlockSpec((bt, S, D), lambda b: (b, 0, 0)),   # x
                pl.BlockSpec((bt, 1, D), lambda b: (b, 0, 0)),   # emb
                full((L, S, S)),                                 # conv weights
                full((L, S, 1)),                                 # conv biases
                full((L, D, D)),                                 # linear w (pre-T)
                full((L, 8, D)),                                 # packed small
            ],
            out_specs=pl.BlockSpec((bt, S, D), lambda b: (b, 0, 0)),
            compiler_params=pltpu.CompilerParams(
                dimension_semantics=("parallel",),
                vmem_limit_bytes=vmem_limit),
            cost_estimate=cost,
        )(*args)

    # Fallback for very large models: layer axis on the grid.  (On v5e, if the
    # per-layer D*D / S*S weight DMA shows up exposed, bump the weight specs
    # to pipeline_mode=pl.Buffered(3).)
    layer = lambda shape: pl.BlockSpec(shape, lambda b, l: (l, 0, 0))
    return pl.pallas_call(
        fused_layer_kernel,
        out_shape=jax.ShapeDtypeStruct((B, S, D), x.dtype),
        grid=(nb, L),
        in_specs=[
            pl.BlockSpec((bt, S, D), lambda b, l: (b, 0, 0)),    # x
            pl.BlockSpec((bt, 1, D), lambda b, l: (b, 0, 0)),    # emb
            layer((1, S, S)),
            layer((1, S, 1)),
            layer((1, D, D)),
            layer((1, 8, D)),
        ],
        out_specs=pl.BlockSpec((bt, S, D), lambda b, l: (b, 0, 0)),
        compiler_params=pltpu.CompilerParams(
            dimension_semantics=("parallel", "arbitrary"),
            vmem_limit_bytes=vmem_limit),
        cost_estimate=cost,
    )(*args)


@jax.jit
def trans_mlp_forward(x, t, pe, params, time_embed):
    """x: (B, S, D) f32, t: (B,) int32 diffusion timesteps."""
    # TimestepEmbedder: pe gather + Linear -> SiLU -> Linear (plain JAX inside
    # the same jit; a separate pallas_call would cost more in dispatch).
    pe_t = pe[t]                                               # (B, D)
    h = pe_t @ time_embed["w1"].T + time_embed["b1"]
    h = h * jax.nn.sigmoid(h)
    emb = h @ time_embed["w2"].T + time_embed["b2"]            # (B, D)
    return run_trans_mlp_blocks(x, emb[:, None, :], params)


# ----------------------------------------------------------------------------
# Model setup (deterministic synthetic parameters)
# ----------------------------------------------------------------------------
def make_positional_encoding(d_model, max_len=5000):
    pe = np.zeros((max_len, d_model), dtype=np.float32)
    position = np.arange(0, max_len, dtype=np.float32)[:, None]
    div_term = np.exp(np.arange(0, d_model, 2, dtype=np.float32)
                      * (-np.log(10000.0) / d_model))
    pe[:, 0::2] = np.sin(position * div_term)
    pe[:, 1::2] = np.cos(position * div_term)[:, : d_model // 2]
    return jnp.asarray(pe)  # (max_len, d_model)


def init_params(key, seq_len, dim, num_layers):
    k = jax.random.split(key, 7)
    # Conv1d(seq_len, seq_len, 1): PyTorch default uniform(-1/sqrt(fan_in), .)
    bound_c = 1.0 / np.sqrt(seq_len)
    w_conv = jax.random.uniform(k[0], (num_layers, seq_len, seq_len),
                                jnp.float32, -bound_c, bound_c)
    b_conv = jax.random.uniform(k[1], (num_layers, seq_len, 1),
                                jnp.float32, -bound_c, bound_c)
    # Linear(dim, dim): xavier_uniform gain=1e-8, bias zero (reset_parameters).
    xav = 1e-8 * np.sqrt(6.0 / (dim + dim))
    w_lin = jax.random.uniform(k[2], (num_layers, dim, dim),
                               jnp.float32, -xav, xav)          # (out, in)
    alpha1 = jnp.ones((num_layers, 1, dim), jnp.float32)
    beta1 = jnp.zeros((num_layers, 1, dim), jnp.float32)
    alpha2 = jnp.ones((num_layers, 1, dim), jnp.float32)
    beta2 = jnp.zeros((num_layers, 1, dim), jnp.float32)
    b_lin = jnp.zeros((num_layers, 1, dim), jnp.float32)
    # Pack the five (1, dim) per-layer params into one (L, 8, dim) array
    # (rows 5..7 are sublane padding): one DMA instead of five.
    small = jnp.concatenate(
        [alpha1, beta1, alpha2, beta2, b_lin,
         jnp.zeros((num_layers, 3, dim), jnp.float32)], axis=1)
    params = dict(
        alpha1=alpha1, beta1=beta1, alpha2=alpha2, beta2=beta2,
        w_conv=w_conv, b_conv=b_conv,
        w_lin_t=jnp.swapaxes(w_lin, -1, -2),                    # pre-transposed
        b_lin=b_lin, small=small,
    )
    bound_t = 1.0 / np.sqrt(dim)
    time_embed = dict(
        w1=jax.random.uniform(k[3], (dim, dim), jnp.float32, -bound_t, bound_t),
        b1=jax.random.uniform(k[4], (1, dim), jnp.float32, -bound_t, bound_t),
        w2=jax.random.uniform(k[5], (dim, dim), jnp.float32, -bound_t, bound_t),
        b2=jax.random.uniform(k[6], (1, dim), jnp.float32, -bound_t, bound_t),
    )
    return params, time_embed


# ----------------------------------------------------------------------------
# Pure-JAX reference (for correctness check)
# ----------------------------------------------------------------------------
def _ref_forward(x, t, pe, p, te):
    silu = lambda z: z * jax.nn.sigmoid(z)

    def ln(v, a, b, eps=1e-5):
        m = v.mean(-1, keepdims=True)
        var = ((v - m) ** 2).mean(-1, keepdims=True)
        return (v - m) / jnp.sqrt(var + eps) * a + b

    h = pe[t] @ te["w1"].T + te["b1"]
    emb = (silu(h) @ te["w2"].T + te["b2"])[:, None, :]
    for i in range(p["w_conv"].shape[0]):
        x = x + emb
        y = ln(x, p["alpha1"][i], p["beta1"][i])
        y = jnp.einsum("os,bsd->bod", p["w_conv"][i], y) + p["b_conv"][i][None]
        x = x + silu(y)
        y = ln(x, p["alpha2"][i], p["beta2"][i])
        y = y @ p["w_lin_t"][i] + p["b_lin"][i]
        x = x + silu(y)
    return x


# ----------------------------------------------------------------------------
if __name__ == "__main__":
    B, S, D, L = 2, 8, 32, 2        # small shapes: batch, seq_len, dim, layers

    key = jax.random.PRNGKey(0)
    kx, kt, kp = jax.random.split(key, 3)

    x = jax.random.normal(kx, (B, S, D), jnp.float32)
    t = jax.random.randint(kt, (B,), 0, 1000, jnp.int32)

    pe = make_positional_encoding(D, max_len=5000)
    params, time_embed = init_params(kp, S, D, L)

    out = trans_mlp_forward(x, t, pe, params, time_embed)
    out = jax.block_until_ready(out)

    ref = _ref_forward(x, t, pe, params, time_embed)
    assert out.shape == (B, S, D)
    np.testing.assert_allclose(np.asarray(out), np.asarray(ref),
                               rtol=1e-5, atol=1e-5)
    print("KERNEL_OK")
</pallas_src>

<mosaic_0001>
module attributes {stable_mosaic.version = 11 : i64} {
  func.func @fused_all_layers_kernel(%arg0: i32, %arg1: memref<2x8x32xf32, #tpu.memory_space<vmem>>, %arg2: memref<2x1x32xf32, #tpu.memory_space<vmem>>, %arg3: memref<2x8x8xf32, #tpu.memory_space<vmem>>, %arg4: memref<2x8x1xf32, #tpu.memory_space<vmem>>, %arg5: memref<2x32x32xf32, #tpu.memory_space<vmem>>, %arg6: memref<2x8x32xf32, #tpu.memory_space<vmem>>, %arg7: memref<2x8x32xf32, #tpu.memory_space<vmem>>) attributes {dimension_semantics = [#tpu.dimension_semantics<parallel>], iteration_bounds = array<i64: 1>, scalar_prefetch = 0 : i64, scratch_operands = 0 : i64, tpu.core_type = #tpu.core_type<tc>, window_params = [{transform_indices = @transform_0, window_bounds = array<i64: 2, 8, 32>}, {transform_indices = @transform_1, window_bounds = array<i64: 2, 1, 32>}, {pipeline_mode = #tpu.pipeline_mode<synchronous>, transform_indices = @transform_2, window_bounds = array<i64: 2, 8, 8>}, {pipeline_mode = #tpu.pipeline_mode<synchronous>, transform_indices = @transform_3, window_bounds = array<i64: 2, 8, 1>}, {pipeline_mode = #tpu.pipeline_mode<synchronous>, transform_indices = @transform_4, window_bounds = array<i64: 2, 32, 32>}, {pipeline_mode = #tpu.pipeline_mode<synchronous>, transform_indices = @transform_5, window_bounds = array<i64: 2, 8, 32>}, {transform_indices = @transform_6, window_bounds = array<i64: 2, 8, 32>}]} {
    %c0 = arith.constant 0 : index
    %c0_0 = arith.constant 0 : index
    %c0_1 = arith.constant 0 : index
    %0 = vector.load %arg1[%c0, %c0_0, %c0_1] : memref<2x8x32xf32, #tpu.memory_space<vmem>>, vector<2x8x32xf32>
    %c0_2 = arith.constant 0 : index
    %c0_3 = arith.constant 0 : index
    %c0_4 = arith.constant 0 : index
    %1 = vector.load %arg2[%c0_2, %c0_3, %c0_4] : memref<2x1x32xf32, #tpu.memory_space<vmem>>, vector<2x1x32xf32>
    %c0_5 = arith.constant 0 : index
    %c0_6 = arith.constant 0 : index
    %c0_7 = arith.constant 0 : index
    %2 = vector.load %arg6[%c0_5, %c0_6, %c0_7] : memref<2x8x32xf32, #tpu.memory_space<vmem>>, vector<1x8x32xf32>
    %3 = vector.shape_cast %2 : vector<1x8x32xf32> to vector<8x32xf32>
    %4 = vector.extract_strided_slice %3 {offsets = [0, 0], sizes = [1, 32], strides = [1, 1]} : vector<8x32xf32> to vector<1x32xf32>
    %5 = vector.extract_strided_slice %3 {offsets = [1, 0], sizes = [1, 32], strides = [1, 1]} : vector<8x32xf32> to vector<1x32xf32>
    %6 = vector.extract_strided_slice %3 {offsets = [2, 0], sizes = [1, 32], strides = [1, 1]} : vector<8x32xf32> to vector<1x32xf32>
    %7 = vector.extract_strided_slice %3 {offsets = [3, 0], sizes = [1, 32], strides = [1, 1]} : vector<8x32xf32> to vector<1x32xf32>
    %8 = vector.extract_strided_slice %3 {offsets = [4, 0], sizes = [1, 32], strides = [1, 1]} : vector<8x32xf32> to vector<1x32xf32>
    %c0_8 = arith.constant 0 : index
    %c0_9 = arith.constant 0 : index
    %c0_10 = arith.constant 0 : index
    %9 = vector.load %arg3[%c0_8, %c0_9, %c0_10] : memref<2x8x8xf32, #tpu.memory_space<vmem>>, vector<1x8x8xf32>
    %10 = vector.shape_cast %9 : vector<1x8x8xf32> to vector<8x8xf32>
    %c0_11 = arith.constant 0 : index
    %c0_12 = arith.constant 0 : index
    %c0_13 = arith.constant 0 : index
    %11 = vector.load %arg4[%c0_11, %c0_12, %c0_13] : memref<2x8x1xf32, #tpu.memory_space<vmem>>, vector<1x8x1xf32>
    %12 = vector.shape_cast %11 : vector<1x8x1xf32> to vector<8x1xf32>
    %c0_14 = arith.constant 0 : index
    %c0_15 = arith.constant 0 : index
    %c0_16 = arith.constant 0 : index
    %13 = vector.load %arg5[%c0_14, %c0_15, %c0_16] : memref<2x32x32xf32, #tpu.memory_space<vmem>>, vector<1x32x32xf32>
    %14 = vector.shape_cast %13 : vector<1x32x32xf32> to vector<32x32xf32>
    %15 = vector.broadcast %1 : vector<2x1x32xf32> to vector<2x8x32xf32>
    %16 = arith.addf %0, %15 : vector<2x8x32xf32>
    %cst = arith.constant dense<0.000000e+00> : vector<2x8xf32>
    %17 = vector.multi_reduction <add>, %16, %cst [2] : vector<2x8x32xf32> to vector<2x8xf32>
    %18 = vector.shape_cast %17 : vector<2x8xf32> to vector<2x8x1xf32>
    %cst_17 = arith.constant 3.200000e+01 : f32
    %19 = vector.broadcast %cst_17 : f32 to vector<2x8x1xf32>
    %20 = arith.divf %18, %19 : vector<2x8x1xf32>
    %21 = arith.mulf %16, %16 : vector<2x8x32xf32>
    %cst_18 = arith.constant dense<0.000000e+00> : vector<2x8xf32>
    %22 = vector.multi_reduction <add>, %21, %cst_18 [2] : vector<2x8x32xf32> to vector<2x8xf32>
    %23 = vector.shape_cast %22 : vector<2x8xf32> to vector<2x8x1xf32>
    %cst_19 = arith.constant 3.200000e+01 : f32
    %24 = vector.broadcast %cst_19 : f32 to vector<2x8x1xf32>
    %25 = arith.divf %23, %24 : vector<2x8x1xf32>
    %26 = arith.mulf %20, %20 : vector<2x8x1xf32>
    %27 = arith.subf %25, %26 : vector<2x8x1xf32>
    %28 = vector.broadcast %20 : vector<2x8x1xf32> to vector<2x8x32xf32>
    %29 = arith.subf %16, %28 : vector<2x8x32xf32>
    %cst_20 = arith.constant 9.99999974E-6 : f32
    %30 = vector.broadcast %cst_20 : f32 to vector<2x8x1xf32>
    %31 = arith.addf %27, %30 : vector<2x8x1xf32>
    %32 = math.rsqrt %31 : vector<2x8x1xf32>
    %33 = vector.broadcast %32 : vector<2x8x1xf32> to vector<2x8x32xf32>
    %34 = arith.mulf %29, %33 : vector<2x8x32xf32>
    %35 = vector.shape_cast %4 : vector<1x32xf32> to vector<1x1x32xf32>
    %36 = vector.broadcast %35 : vector<1x1x32xf32> to vector<2x8x32xf32>
    %37 = arith.mulf %34, %36 : vector<2x8x32xf32>
    %38 = vector.shape_cast %5 : vector<1x32xf32> to vector<1x1x32xf32>
    %39 = vector.broadcast %38 : vector<1x1x32xf32> to vector<2x8x32xf32>
    %40 = arith.addf %37, %39 : vector<2x8x32xf32>
    %41 = vector.shape_cast %10 : vector<8x8xf32> to vector<1x8x8xf32>
    %42 = vector.broadcast %41 : vector<1x8x8xf32> to vector<2x8x8xf32>
    %cst_21 = arith.constant dense<0.000000e+00> : vector<2x8x32xf32>
    %43 = tpu.matmul %42, %40, %cst_21 {dimension_numbers = #tpu.dot_dimension_numbers<[2], [1], [1], [2], [0, 0, 0, 1, 1, 2], [0], [0]>} : vector<2x8x8xf32>, vector<2x8x32xf32>, vector<2x8x32xf32> -> vector<2x8x32xf32>
    %44 = vector.shape_cast %12 : vector<8x1xf32> to vector<1x8x1xf32>
    %45 = vector.broadcast %44 : vector<1x8x1xf32> to vector<2x8x32xf32>
    %46 = arith.addf %43, %45 : vector<2x8x32xf32>
    %47 = arith.negf %46 : vector<2x8x32xf32>
    %48 = math.exp %47 : vector<2x8x32xf32>
    %cst_22 = arith.constant 1.000000e+00 : f32
    %49 = vector.broadcast %cst_22 : f32 to vector<2x8x32xf32>
    %50 = arith.addf %49, %48 : vector<2x8x32xf32>
    %51 = arith.divf %49, %50 : vector<2x8x32xf32>
    %52 = arith.mulf %46, %51 : vector<2x8x32xf32>
    %53 = arith.addf %16, %52 : vector<2x8x32xf32>
    %cst_23 = arith.constant dense<0.000000e+00> : vector<2x8xf32>
    %54 = vector.multi_reduction <add>, %53, %cst_23 [2] : vector<2x8x32xf32> to vector<2x8xf32>
    %55 = vector.shape_cast %54 : vector<2x8xf32> to vector<2x8x1xf32>
    %cst_24 = arith.constant 3.200000e+01 : f32
    %56 = vector.broadcast %cst_24 : f32 to vector<2x8x1xf32>
    %57 = arith.divf %55, %56 : vector<2x8x1xf32>
    %58 = arith.mulf %53, %53 : vector<2x8x32xf32>
    %cst_25 = arith.constant dense<0.000000e+00> : vector<2x8xf32>
    %59 = vector.multi_reduction <add>, %58, %cst_25 [2] : vector<2x8x32xf32> to vector<2x8xf32>
    %60 = vector.shape_cast %59 : vector<2x8xf32> to vector<2x8x1xf32>
    %cst_26 = arith.constant 3.200000e+01 : f32
    %61 = vector.broadcast %cst_26 : f32 to vector<2x8x1xf32>
    %62 = arith.divf %60, %61 : vector<2x8x1xf32>
    %63 = arith.mulf %57, %57 : vector<2x8x1xf32>
    %64 = arith.subf %62, %63 : vector<2x8x1xf32>
    %65 = vector.broadcast %57 : vector<2x8x1xf32> to vector<2x8x32xf32>
    %66 = arith.subf %53, %65 : vector<2x8x32xf32>
    %cst_27 = arith.constant 9.99999974E-6 : f32
    %67 = vector.broadcast %cst_27 : f32 to vector<2x8x1xf32>
    %68 = arith.addf %64, %67 : vector<2x8x1xf32>
    %69 = math.rsqrt %68 : vector<2x8x1xf32>
    %70 = vector.broadcast %69 : vector<2x8x1xf32> to vector<2x8x32xf32>
    %71 = arith.mulf %66, %70 : vector<2x8x32xf32>
    %72 = vector.shape_cast %6 : vector<1x32xf32> to vector<1x1x32xf32>
    %73 = vector.broadcast %72 : vector<1x1x32xf32> to vector<2x8x32xf32>
    %74 = arith.mulf %71, %73 : vector<2x8x32xf32>
    %75 = vector.shape_cast %7 : vector<1x32xf32> to vector<1x1x32xf32>
    %76 = vector.broadcast %75 : vector<1x1x32xf32> to vector<2x8x32xf32>
    %77 = arith.addf %74, %76 : vector<2x8x32xf32>
    %78 = vector.shape_cast %77 : vector<2x8x32xf32> to vector<16x32xf32>
    %cst_28 = arith.constant dense<0.000000e+00> : vector<16x32xf32>
    %79 = tpu.matmul %78, %14, %cst_28 {dimension_numbers = #tpu.dot_dimension_numbers<[1], [0], [0], [1], [0, 0, 1, 1], [], []>} : vector<16x32xf32>, vector<32x32xf32>, vector<16x32xf32> -> vector<16x32xf32>
    %80 = vector.shape_cast %79 : vector<16x32xf32> to vector<2x8x32xf32>
    %81 = vector.shape_cast %8 : vector<1x32xf32> to vector<1x1x32xf32>
    %82 = vector.broadcast %81 : vector<1x1x32xf32> to vector<2x8x32xf32>
    %83 = arith.addf %80, %82 : vector<2x8x32xf32>
    %84 = arith.negf %83 : vector<2x8x32xf32>
    %85 = math.exp %84 : vector<2x8x32xf32>
    %cst_29 = arith.constant 1.000000e+00 : f32
    %86 = vector.broadcast %cst_29 : f32 to vector<2x8x32xf32>
    %87 = arith.addf %86, %85 : vector<2x8x32xf32>
    %88 = arith.divf %86, %87 : vector<2x8x32xf32>
    %89 = arith.mulf %83, %88 : vector<2x8x32xf32>
    %90 = arith.addf %53, %89 : vector<2x8x32xf32>
    %c1 = arith.constant 1 : index
    %c0_30 = arith.constant 0 : index
    %c0_31 = arith.constant 0 : index
    %91 = vector.load %arg6[%c1, %c0_30, %c0_31] : memref<2x8x32xf32, #tpu.memory_space<vmem>>, vector<1x8x32xf32>
    %92 = vector.shape_cast %91 : vector<1x8x32xf32> to vector<8x32xf32>
    %93 = vector.extract_strided_slice %92 {offsets = [0, 0], sizes = [1, 32], strides = [1, 1]} : vector<8x32xf32> to vector<1x32xf32>
    %94 = vector.extract_strided_slice %92 {offsets = [1, 0], sizes = [1, 32], strides = [1, 1]} : vector<8x32xf32> to vector<1x32xf32>
    %95 = vector.extract_strided_slice %92 {offsets = [2, 0], sizes = [1, 32], strides = [1, 1]} : vector<8x32xf32> to vector<1x32xf32>
    %96 = vector.extract_strided_slice %92 {offsets = [3, 0], sizes = [1, 32], strides = [1, 1]} : vector<8x32xf32> to vector<1x32xf32>
    %97 = vector.extract_strided_slice %92 {offsets = [4, 0], sizes = [1, 32], strides = [1, 1]} : vector<8x32xf32> to vector<1x32xf32>
    %c1_32 = arith.constant 1 : index
    %c0_33 = arith.constant 0 : index
    %c0_34 = arith.constant 0 : index
    %98 = vector.load %arg3[%c1_32, %c0_33, %c0_34] : memref<2x8x8xf32, #tpu.memory_space<vmem>>, vector<1x8x8xf32>
    %99 = vector.shape_cast %98 : vector<1x8x8xf32> to vector<8x8xf32>
    %c1_35 = arith.constant 1 : index
    %c0_36 = arith.constant 0 : index
    %c0_37 = arith.constant 0 : index
    %100 = vector.load %arg4[%c1_35, %c0_36, %c0_37] : memref<2x8x1xf32, #tpu.memory_space<vmem>>, vector<1x8x1xf32>
    %101 = vector.shape_cast %100 : vector<1x8x1xf32> to vector<8x1xf32>
    %c1_38 = arith.constant 1 : index
    %c0_39 = arith.constant 0 : index
    %c0_40 = arith.constant 0 : index
    %102 = vector.load %arg5[%c1_38, %c0_39, %c0_40] : memref<2x32x32xf32, #tpu.memory_space<vmem>>, vector<1x32x32xf32>
    %103 = vector.shape_cast %102 : vector<1x32x32xf32> to vector<32x32xf32>
    %104 = vector.broadcast %1 : vector<2x1x32xf32> to vector<2x8x32xf32>
    %105 = arith.addf %90, %104 : vector<2x8x32xf32>
    %cst_41 = arith.constant dense<0.000000e+00> : vector<2x8xf32>
    %106 = vector.multi_reduction <add>, %105, %cst_41 [2] : vector<2x8x32xf32> to vector<2x8xf32>
    %107 = vector.shape_cast %106 : vector<2x8xf32> to vector<2x8x1xf32>
    %cst_42 = arith.constant 3.200000e+01 : f32
    %108 = vector.broadcast %cst_42 : f32 to vector<2x8x1xf32>
    %109 = arith.divf %107, %108 : vector<2x8x1xf32>
    %110 = arith.mulf %105, %105 : vector<2x8x32xf32>
    %cst_43 = arith.constant dense<0.000000e+00> : vector<2x8xf32>
    %111 = vector.multi_reduction <add>, %110, %cst_43 [2] : vector<2x8x32xf32> to vector<2x8xf32>
    %112 = vector.shape_cast %111 : vector<2x8xf32> to vector<2x8x1xf32>
    %cst_44 = arith.constant 3.200000e+01 : f32
    %113 = vector.broadcast %cst_44 : f32 to vector<2x8x1xf32>
    %114 = arith.divf %112, %113 : vector<2x8x1xf32>
    %115 = arith.mulf %109, %109 : vector<2x8x1xf32>
    %116 = arith.subf %114, %115 : vector<2x8x1xf32>
    %117 = vector.broadcast %109 : vector<2x8x1xf32> to vector<2x8x32xf32>
    %118 = arith.subf %105, %117 : vector<2x8x32xf32>
    %cst_45 = arith.constant 9.99999974E-6 : f32
    %119 = vector.broadcast %cst_45 : f32 to vector<2x8x1xf32>
    %120 = arith.addf %116, %119 : vector<2x8x1xf32>
    %121 = math.rsqrt %120 : vector<2x8x1xf32>
    %122 = vector.broadcast %121 : vector<2x8x1xf32> to vector<2x8x32xf32>
    %123 = arith.mulf %118, %122 : vector<2x8x32xf32>
    %124 = vector.shape_cast %93 : vector<1x32xf32> to vector<1x1x32xf32>
    %125 = vector.broadcast %124 : vector<1x1x32xf32> to vector<2x8x32xf32>
    %126 = arith.mulf %123, %125 : vector<2x8x32xf32>
    %127 = vector.shape_cast %94 : vector<1x32xf32> to vector<1x1x32xf32>
    %128 = vector.broadcast %127 : vector<1x1x32xf32> to vector<2x8x32xf32>
    %129 = arith.addf %126, %128 : vector<2x8x32xf32>
    %130 = vector.shape_cast %99 : vector<8x8xf32> to vector<1x8x8xf32>
    %131 = vector.broadcast %130 : vector<1x8x8xf32> to vector<2x8x8xf32>
    %cst_46 = arith.constant dense<0.000000e+00> : vector<2x8x32xf32>
    %132 = tpu.matmul %131, %129, %cst_46 {dimension_numbers = #tpu.dot_dimension_numbers<[2], [1], [1], [2], [0, 0, 0, 1, 1, 2], [0], [0]>} : vector<2x8x8xf32>, vector<2x8x32xf32>, vector<2x8x32xf32> -> vector<2x8x32xf32>
    %133 = vector.shape_cast %101 : vector<8x1xf32> to vector<1x8x1xf32>
    %134 = vector.broadcast %133 : vector<1x8x1xf32> to vector<2x8x32xf32>
    %135 = arith.addf %132, %134 : vector<2x8x32xf32>
    %136 = arith.negf %135 : vector<2x8x32xf32>
    %137 = math.exp %136 : vector<2x8x32xf32>
    %cst_47 = arith.constant 1.000000e+00 : f32
    %138 = vector.broadcast %cst_47 : f32 to vector<2x8x32xf32>
    %139 = arith.addf %138, %137 : vector<2x8x32xf32>
    %140 = arith.divf %138, %139 : vector<2x8x32xf32>
    %141 = arith.mulf %135, %140 : vector<2x8x32xf32>
    %142 = arith.addf %105, %141 : vector<2x8x32xf32>
    %cst_48 = arith.constant dense<0.000000e+00> : vector<2x8xf32>
    %143 = vector.multi_reduction <add>, %142, %cst_48 [2] : vector<2x8x32xf32> to vector<2x8xf32>
    %144 = vector.shape_cast %143 : vector<2x8xf32> to vector<2x8x1xf32>
    %cst_49 = arith.constant 3.200000e+01 : f32
    %145 = vector.broadcast %cst_49 : f32 to vector<2x8x1xf32>
    %146 = arith.divf %144, %145 : vector<2x8x1xf32>
    %147 = arith.mulf %142, %142 : vector<2x8x32xf32>
    %cst_50 = arith.constant dense<0.000000e+00> : vector<2x8xf32>
    %148 = vector.multi_reduction <add>, %147, %cst_50 [2] : vector<2x8x32xf32> to vector<2x8xf32>
    %149 = vector.shape_cast %148 : vector<2x8xf32> to vector<2x8x1xf32>
    %cst_51 = arith.constant 3.200000e+01 : f32
    %150 = vector.broadcast %cst_51 : f32 to vector<2x8x1xf32>
    %151 = arith.divf %149, %150 : vector<2x8x1xf32>
    %152 = arith.mulf %146, %146 : vector<2x8x1xf32>
    %153 = arith.subf %151, %152 : vector<2x8x1xf32>
    %154 = vector.broadcast %146 : vector<2x8x1xf32> to vector<2x8x32xf32>
    %155 = arith.subf %142, %154 : vector<2x8x32xf32>
    %cst_52 = arith.constant 9.99999974E-6 : f32
    %156 = vector.broadcast %cst_52 : f32 to vector<2x8x1xf32>
    %157 = arith.addf %153, %156 : vector<2x8x1xf32>
    %158 = math.rsqrt %157 : vector<2x8x1xf32>
    %159 = vector.broadcast %158 : vector<2x8x1xf32> to vector<2x8x32xf32>
    %160 = arith.mulf %155, %159 : vector<2x8x32xf32>
    %161 = vector.shape_cast %95 : vector<1x32xf32> to vector<1x1x32xf32>
    %162 = vector.broadcast %161 : vector<1x1x32xf32> to vector<2x8x32xf32>
    %163 = arith.mulf %160, %162 : vector<2x8x32xf32>
    %164 = vector.shape_cast %96 : vector<1x32xf32> to vector<1x1x32xf32>
    %165 = vector.broadcast %164 : vector<1x1x32xf32> to vector<2x8x32xf32>
    %166 = arith.addf %163, %165 : vector<2x8x32xf32>
    %167 = vector.shape_cast %166 : vector<2x8x32xf32> to vector<16x32xf32>
    %cst_53 = arith.constant dense<0.000000e+00> : vector<16x32xf32>
    %168 = tpu.matmul %167, %103, %cst_53 {dimension_numbers = #tpu.dot_dimension_numbers<[1], [0], [0], [1], [0, 0, 1, 1], [], []>} : vector<16x32xf32>, vector<32x32xf32>, vector<16x32xf32> -> vector<16x32xf32>
    %169 = vector.shape_cast %168 : vector<16x32xf32> to vector<2x8x32xf32>
    %170 = vector.shape_cast %97 : vector<1x32xf32> to vector<1x1x32xf32>
    %171 = vector.broadcast %170 : vector<1x1x32xf32> to vector<2x8x32xf32>
    %172 = arith.addf %169, %171 : vector<2x8x32xf32>
    %173 = arith.negf %172 : vector<2x8x32xf32>
    %174 = math.exp %173 : vector<2x8x32xf32>
    %cst_54 = arith.constant 1.000000e+00 : f32
    %175 = vector.broadcast %cst_54 : f32 to vector<2x8x32xf32>
    %176 = arith.addf %175, %174 : vector<2x8x32xf32>
    %177 = arith.divf %175, %176 : vector<2x8x32xf32>
    %178 = arith.mulf %172, %177 : vector<2x8x32xf32>
    %179 = arith.addf %142, %178 : vector<2x8x32xf32>
    %c0_55 = arith.constant 0 : index
    %c0_56 = arith.constant 0 : index
    %c0_57 = arith.constant 0 : index
    %180 = vector.load %arg7[%c0_55, %c0_56, %c0_57] : memref<2x8x32xf32, #tpu.memory_space<vmem>>, vector<2x8x32xf32>
    tpu.vector_store %arg7[%c0_55, %c0_56, %c0_57], %179 {strides = array<i32>} : memref<2x8x32xf32, #tpu.memory_space<vmem>>, vector<2x8x32xf32>,
    return
  }
  func.func @transform_0(%arg0: i32) -> (i32, i32, i32) {
    %c0_i32 = arith.constant 0 : i32
    %c0_i32_0 = arith.constant 0 : i32
    %c0_i32_1 = arith.constant 0 : i32
    return %arg0, %c0_i32, %c0_i32_0 : i32, i32, i32
  }
  func.func @transform_1(%arg0: i32) -> (i32, i32, i32) {
    %c0_i32 = arith.constant 0 : i32
    %c0_i32_0 = arith.constant 0 : i32
    %c0_i32_1 = arith.constant 0 : i32
    return %arg0, %c0_i32, %c0_i32_0 : i32, i32, i32
  }
  func.func @transform_2(%arg0: i32) -> (i32, i32, i32) {
    %c0_i32 = arith.constant 0 : i32
    %c0_i32_0 = arith.constant 0 : i32
    %c0_i32_1 = arith.constant 0 : i32
    %c0_i32_2 = arith.constant 0 : i32
    return %c0_i32, %c0_i32_0, %c0_i32_1 : i32, i32, i32
  }
  func.func @transform_3(%arg0: i32) -> (i32, i32, i32) {
    %c0_i32 = arith.constant 0 : i32
    %c0_i32_0 = arith.constant 0 : i32
    %c0_i32_1 = arith.constant 0 : i32
    %c0_i32_2 = arith.constant 0 : i32
    return %c0_i32, %c0_i32_0, %c0_i32_1 : i32, i32, i32
  }
  func.func @transform_4(%arg0: i32) -> (i32, i32, i32) {
    %c0_i32 = arith.constant 0 : i32
    %c0_i32_0 = arith.constant 0 : i32
    %c0_i32_1 = arith.constant 0 : i32
    %c0_i32_2 = arith.constant 0 : i32
    return %c0_i32, %c0_i32_0, %c0_i32_1 : i32, i32, i32
  }
  func.func @transform_5(%arg0: i32) -> (i32, i32, i32) {
    %c0_i32 = arith.constant 0 : i32
    %c0_i32_0 = arith.constant 0 : i32
    %c0_i32_1 = arith.constant 0 : i32
    %c0_i32_2 = arith.constant 0 : i32
    return %c0_i32, %c0_i32_0, %c0_i32_1 : i32, i32, i32
  }
  func.func @transform_6(%arg0: i32) -> (i32, i32, i32) {
    %c0_i32 = arith.constant 0 : i32
    %c0_i32_0 = arith.constant 0 : i32
    %c0_i32_1 = arith.constant 0 : i32
    return %arg0, %c0_i32, %c0_i32_0 : i32, i32, i32
  }
}

</mosaic_0001>

<llo_original>
// kernel: trans_mlp_forward.1
$region0: #{trans_mlp_forward.1}
  #allocation0 [shape = 'u32[]', space=smem, size = 0x4, offset = 0x4, fixed_abs, tag = 'smem constant byte address 0x4 - core index']
  #allocation1 [shape = 'u32[72,128]{1,0:T(1,128)}', space=vmem, size = 0x9000, scoped, tag = 'internal scratch']
  %s0 = inlined_call_operand.vmem [shape: f32[2,8,32], index: 0, kind: input, shape index: {}]
  %s1 = inlined_call_operand.vmem [shape: f32[2,1,32], index: 1, kind: input, shape index: {}]
  %s2 = inlined_call_operand.vmem [shape: f32[2,8,8], index: 2, kind: input, shape index: {}]
  %s3 = inlined_call_operand.vmem [shape: f32[2,8,1], index: 3, kind: input, shape index: {}]
  %s4 = inlined_call_operand.vmem [shape: f32[2,32,32], index: 4, kind: input, shape index: {}]
  %s5 = inlined_call_operand.vmem [shape: f32[2,8,32], index: 5, kind: input, shape index: {}]
  %s6 = inlined_call_operand.hbm [shape: f32[2,8,32], index: 6, kind: output, shape index: {}]
  %s7 = sld [smem:[#allocation0]]
  $region34: #{trans_mlp_forward.1} parent=0
    _
  %s9 = ssub.s32 1, %s7
  %s10 = scalar_select 0, %s9, %s7
  $region1: #{trans_mlp_forward.1} parent=0
    #allocation2 [shape = 'u8[8192]{0}', space=vmem, size = 0x2000, scoped, tag = 'output window, operand 0, single buffered']
    #allocation3 [shape = 's32[1]{0}', space=sflag, size = 0x4, scoped, tag = 'scoped memory for trans_mlp_forward.1']
    %11 = vsyncpa [#allocation3], 0
    // Predicated region
    $region2: #{trans_mlp_forward.1} parent=1 // pred_check
      _
    $region3: #{trans_mlp_forward.1} parent=1 // pred_check_branch
      %13 = sbr.rel (0) target = $region5
    $region4: #{trans_mlp_forward.1} parent=1 // pred_region
      _
    $region5: #{trans_mlp_forward.1} parent=1 // pred_fallthru
      _
    // Predicated region
    $region6: #{trans_mlp_forward.1} parent=1 // pred_check
      _
    $region7: #{trans_mlp_forward.1} parent=1 // pred_check_branch
      %15 = sbr.rel (0) target = $region9
    $region8: #{trans_mlp_forward.1} parent=1 // pred_region
      _
    $region9: #{trans_mlp_forward.1} parent=1 // pred_fallthru
      _
    // Predicated region
    $region10: #{trans_mlp_forward.1} parent=1 // pred_check
      _
    $region11: #{trans_mlp_forward.1} parent=1 // pred_check_branch
      %17 = sbr.rel (0) target = $region13
    $region12: #{trans_mlp_forward.1} parent=1 // pred_region
      _
    $region13: #{trans_mlp_forward.1} parent=1 // pred_fallthru
      _
    // Predicated region
    $region14: #{trans_mlp_forward.1} parent=1 // pred_check
      _
    $region15: #{trans_mlp_forward.1} parent=1 // pred_check_branch
      %19 = sbr.rel (0) target = $region17
    $region16: #{trans_mlp_forward.1} parent=1 // pred_region
      _
    $region17: #{trans_mlp_forward.1} parent=1 // pred_fallthru
      _
    // Predicated region
    $region18: #{trans_mlp_forward.1} parent=1 // pred_check
      _
    $region19: #{trans_mlp_forward.1} parent=1 // pred_check_branch
      %21 = sbr.rel (0) target = $region21
    $region20: #{trans_mlp_forward.1} parent=1 // pred_region
      _
    $region21: #{trans_mlp_forward.1} parent=1 // pred_fallthru
      _
    // Predicated region
    $region22: #{trans_mlp_forward.1} parent=1 // pred_check
      _
    $region23: #{trans_mlp_forward.1} parent=1 // pred_check_branch
      %23 = sbr.rel (0) target = $region25
    $region24: #{trans_mlp_forward.1} parent=1 // pred_region
      _
    $region25: #{trans_mlp_forward.1} parent=1 // pred_fallthru
      _
    %v24 = vld [vmem:[%s0] sm:$0xff]
    %v25 = vld [vmem:[%s0 + $0x8] sm:$0xff]
    %v26 = vld [vmem:[%s1] sm:$0x1]
    %v27 = vld [vmem:[%s1 + $0x1] sm:$0x1]
    %v28 = vld [vmem:[%s5] sm:$0xff]
    %v29 = vld [vmem:[%s2] sm:$0xff]
    %v30 = vld [vmem:[%s3] sm:$0xff]
    %v31 = vld [vmem:[%s4] sm:$0xff]
    %v32 = vld [vmem:[%s4 + $0x8] sm:$0xff]
    %v33 = vld [vmem:[%s4 + $0x10] sm:$0xff]
    %v34 = vld [vmem:[%s4 + $0x18] sm:$0xff]
    %v37 = vperm.slane %v26, 0
    %v38 = vperm.slane %v27, 0
    %v41 = vadd.f32 %v24, %v37
    %v42 = vadd.f32 %v25, %v38
    %vm43 = vcmask 261120
    %v44 = vsel %vm43, %v41, 0.0
    %45 = vadd.xlane.f32.xlu0 %v44
    %v46 = vpop.xlane.xlu0 %45
    %v47 = vsel %vm43, %v42, 0.0
    %48 = vadd.xlane.f32.xlu0 %v47
    %v49 = vpop.xlane.xlu0 %48
    %v50 = vrcp.pop 32.0
    %v51 = vmul.f32 32.0, %v50
    %v52 = vsub.f32 1.0, %v51
    %v53 = vmul.f32 %v50, %v52
    %v54 = vadd.f32 %v50, %v53
    %vm55 = vweird.f32 %v50
    %v56 = vsel %vm55, %v50, %v54
    %v57 = vmul.f32 %v46, %v56
    %v58 = vmul.f32 %v49, %v56
    %v59 = vmul.f32 %v41, %v41
    %v60 = vmul.f32 %v42, %v42
    %v61 = vsel %vm43, %v59, 0.0
    %62 = vadd.xlane.f32.xlu0 %v61
    %v63 = vpop.xlane.xlu0 %62
    %v64 = vsel %vm43, %v60, 0.0
    %65 = vadd.xlane.f32.xlu0 %v64
    %v66 = vpop.xlane.xlu0 %65
    %v67 = vmul.f32 %v63, %v56
    %v68 = vmul.f32 %v66, %v56
    %v69 = vmul.f32 %v57, %v57
    %v70 = vmul.f32 %v58, %v58
    %v71 = vsub.f32 %v67, %v69
    %v72 = vsub.f32 %v68, %v70
    %v73 = vsub.f32 %v41, %v57
    %v74 = vsub.f32 %v42, %v58
    %v75 = vadd.f32 %v71, 1e-05
    %v76 = vadd.f32 %v72, 1e-05
    %v77 = vrsqrt.pop %v75
    %v78 = vmul.f32 %v77, %v75
    %v79 = vmul.f32 %v78, %v77
    %v80 = vmul.f32 0.5, %v79
    %v81 = vsub.f32 1.5, %v80
    %v82 = vmul.f32 %v77, %v81
    %vm83 = vweird.f32 %v75
    %vm84 = vweird.f32 %v77
    %vm85 = vmor %vm83, %vm84
    %v86 = vsel %vm85, %v77, %v82
    %v87 = vrsqrt.pop %v76
    %v88 = vmul.f32 %v87, %v76
    %v89 = vmul.f32 %v88, %v87
    %v90 = vmul.f32 0.5, %v89
    %v91 = vsub.f32 1.5, %v90
    %v92 = vmul.f32 %v87, %v91
    %vm93 = vweird.f32 %v76
    %vm94 = vweird.f32 %v87
    %vm95 = vmor %vm93, %vm94
    %v96 = vsel %vm95, %v87, %v92
    %v97 = vmul.f32 %v73, %v86
    %v98 = vmul.f32 %v74, %v96
    %v99 = vperm.slane %v28, 0
    %v100 = vmul.f32 %v97, %v99
    %v101 = vmul.f32 %v98, %v99
    %v102 = vperm.slane %v28, 1
    %v103 = vadd.f32 %v100, %v102
    %v104 = vadd.f32 %v101, %v102
    %106 = vset.pattern.permute.xlu0 0
    %107 = vperm.xlu0 %106, %v30
    %v108 = vpop.permute.xlu0 %107
    %vm110 = vcmask 64512
    %v112 = vsel %vm110, %v29, 0
    %114 = vmatpush.msra.mxu0 0.0
    %115 = vmatpush.msra.mxu0 0.0
    %116 = vmatpush.msra.mxu0 0.0
    %117 = vmatpush.msra.mxu0 0.0
    %118 = vmatpush.msra.mxu0 0.0
    %119 = vmatpush.msra.mxu0 0.0
    %120 = vmatpush.msra.mxu0 0.0
    %121 = vmatpush.msra.mxu0 0.0
    %122 = vmatpush.msra.mxu0 0.0
    %123 = vmatpush.msra.mxu0 0.0
    %124 = vmatpush.msra.mxu0 0.0
    %125 = vmatpush.msra.mxu0 0.0
    %126 = vmatpush.msra.mxu0 0.0
    %127 = vmatpush.msra.mxu0 0.0
    %128 = vmatpush.msra.mxu0 0.0
    %129 = vmatpush.msra.mxu0 %v103
    %130 = vmatmul.f32.gmra.mxu0 %v112
    %v131 = vpop.f32.mrf.mxu0
    %v132 = vadd.f32 %v108, %v131
    %133 = vdwg.mxu0
    %134 = vmatpush.msra.mxu0 0.0
    %135 = vmatpush.msra.mxu0 0.0
    %136 = vmatpush.msra.mxu0 0.0
    %137 = vmatpush.msra.mxu0 0.0
    %138 = vmatpush.msra.mxu0 0.0
    %139 = vmatpush.msra.mxu0 0.0
    %140 = vmatpush.msra.mxu0 0.0
    %141 = vmatpush.msra.mxu0 0.0
    %142 = vmatpush.msra.mxu0 0.0
    %143 = vmatpush.msra.mxu0 0.0
    %144 = vmatpush.msra.mxu0 0.0
    %145 = vmatpush.msra.mxu0 0.0
    %146 = vmatpush.msra.mxu0 0.0
    %147 = vmatpush.msra.mxu0 0.0
    %148 = vmatpush.msra.mxu0 0.0
    %149 = vmatpush.msra.mxu0 %v104
    %150 = vmatmul.f32.gmra.mxu0 %v112
    %v151 = vpop.f32.mrf.mxu0
    %v152 = vadd.f32 %v108, %v151
    %153 = vdwg.mxu0
    %v154 = vxor.u32 %v132, 2147483648
    %v155 = vxor.u32 %v152, 2147483648
    %v156 = vmul.f32 %v154, 1.442695
    %v157 = vpow.pop %v156
    %v158 = vmul.f32 %v155, 1.442695
    %v159 = vpow.pop %v158
    %v160 = vadd.f32 %v157, 1.0
    %v161 = vadd.f32 %v159, 1.0
    %v162 = vrcp.pop %v160
    %v163 = vmul.f32 %v160, %v162
    %v164 = vsub.f32 1.0, %v163
    %v165 = vmul.f32 %v162, %v164
    %v166 = vadd.f32 %v162, %v165
    %vm167 = vweird.f32 %v160
    %vm168 = vweird.f32 %v162
    %vm169 = vmor %vm167, %vm168
    %v170 = vsel %vm169, %v162, %v166
    %v171 = vand.u32 2147483647, %v160
    %vm172 = vcmp.eq.f32.partialorder %v171, 8.507059e+37
    %v173 = vand.u32 %v160, 2147483648
    %v174 = vor.u32 1.1754944e-38, %v173
    %v175 = vsel %vm172, %v174, %v170
    %v176 = vmul.f32 1.0, %v175
    %v177 = vrcp.pop %v161
    %v178 = vmul.f32 %v161, %v177
    %v179 = vsub.f32 1.0, %v178
    %v180 = vmul.f32 %v177, %v179
    %v181 = vadd.f32 %v177, %v180
    %vm182 = vweird.f32 %v161
    %vm183 = vweird.f32 %v177
    %vm184 = vmor %vm182, %vm183
    %v185 = vsel %vm184, %v177, %v181
    %v186 = vand.u32 2147483647, %v161
    %vm187 = vcmp.eq.f32.partialorder %v186, 8.507059e+37
    %v188 = vand.u32 %v161, 2147483648
    %v189 = vor.u32 1.1754944e-38, %v188
    %v190 = vsel %vm187, %v189, %v185
    %v191 = vmul.f32 1.0, %v190
    %v192 = vmul.f32 %v132, %v176
    %v193 = vmul.f32 %v152, %v191
    %v194 = vadd.f32 %v41, %v192
    %v195 = vadd.f32 %v42, %v193
    %v196 = vsel %vm43, %v194, 0.0
    %197 = vadd.xlane.f32.xlu0 %v196
    %v198 = vpop.xlane.xlu0 %197
    %v199 = vsel %vm43, %v195, 0.0
    %200 = vadd.xlane.f32.xlu0 %v199
    %v201 = vpop.xlane.xlu0 %200
    %v202 = vmul.f32 %v198, %v56
    %v203 = vmul.f32 %v201, %v56
    %v204 = vmul.f32 %v194, %v194
    %v205 = vmul.f32 %v195, %v195
    %v206 = vsel %vm43, %v204, 0.0
    %207 = vadd.xlane.f32.xlu0 %v206
    %v208 = vpop.xlane.xlu0 %207
    %v209 = vsel %vm43, %v205, 0.0
    %210 = vadd.xlane.f32.xlu0 %v209
    %v211 = vpop.xlane.xlu0 %210
    %v212 = vmul.f32 %v208, %v56
    %v213 = vmul.f32 %v211, %v56
    %v214 = vmul.f32 %v202, %v202
    %v215 = vmul.f32 %v203, %v203
    %v216 = vsub.f32 %v212, %v214
    %v217 = vsub.f32 %v213, %v215
    %v218 = vsub.f32 %v194, %v202
    %v219 = vsub.f32 %v195, %v203
    %v220 = vadd.f32 %v216, 1e-05
    %v221 = vadd.f32 %v217, 1e-05
    %v222 = vrsqrt.pop %v220
    %v223 = vmul.f32 %v222, %v220
    %v224 = vmul.f32 %v223, %v222
    %v225 = vmul.f32 0.5, %v224
    %v226 = vsub.f32 1.5, %v225
    %v227 = vmul.f32 %v222, %v226
    %vm228 = vweird.f32 %v220
    %vm229 = vweird.f32 %v222
    %vm230 = vmor %vm228, %vm229
    %v231 = vsel %vm230, %v222, %v227
    %v232 = vrsqrt.pop %v221
    %v233 = vmul.f32 %v232, %v221
    %v234 = vmul.f32 %v233, %v232
    %v235 = vmul.f32 0.5, %v234
    %v236 = vsub.f32 1.5, %v235
    %v237 = vmul.f32 %v232, %v236
    %vm238 = vweird.f32 %v221
    %vm239 = vweird.f32 %v232
    %vm240 = vmor %vm238, %vm239
    %v241 = vsel %vm240, %v232, %v237
    %v242 = vmul.f32 %v218, %v231
    %v243 = vmul.f32 %v219, %v241
    %v244 = vperm.slane %v28, 2
    %v245 = vmul.f32 %v242, %v244
    %v246 = vmul.f32 %v243, %v244
    %v247 = vperm.slane %v28, 3
    %v248 = vadd.f32 %v245, %v247
    %v249 = vadd.f32 %v246, %v247
    %v251 = vsel %vm43, %v248, 0
    %v254 = vsel %vm43, %v249, 0
    %256 = vmatpush.msra.mxu0 0.0
    %257 = vmatpush.msra.mxu0 0.0
    %258 = vmatpush.msra.mxu0 0.0
    %259 = vmatpush.msra.mxu0 0.0
    %260 = vmatpush.msra.mxu0 0.0
    %261 = vmatpush.msra.mxu0 0.0
    %262 = vmatpush.msra.mxu0 0.0
    %263 = vmatpush.msra.mxu0 0.0
    %264 = vmatpush.msra.mxu0 0.0
    %265 = vmatpush.msra.mxu0 0.0
    %266 = vmatpush.msra.mxu0 0.0
    %267 = vmatpush.msra.mxu0 0.0
    %268 = vmatpush.msra.mxu0 %v34
    %269 = vmatpush.msra.mxu0 %v33
    %270 = vmatpush.msra.mxu0 %v32
    %271 = vmatpush.msra.mxu0 %v31
    %272 = vmatmul.f32.gmra.mxu0 %v251
    %v273 = vpop.f32.mrf.mxu0
    %v274 = vadd.f32 0.0, %v273
    %275 = vmatmul.f32.gmra.mxu0 %v254
    %v276 = vpop.f32.mrf.mxu0
    %v277 = vadd.f32 0.0, %v276
    %278 = vdwg.mxu0
    %v279 = vperm.slane %v28, 4
    %v280 = vadd.f32 %v274, %v279
    %v281 = vadd.f32 %v277, %v279
    %v282 = vxor.u32 %v280, 2147483648
    %v283 = vxor.u32 %v281, 2147483648
    %v284 = vmul.f32 %v282, 1.442695
    %v285 = vpow.pop %v284
    %v286 = vmul.f32 %v283, 1.442695
    %v287 = vpow.pop %v286
    %v288 = vadd.f32 %v285, 1.0
    %v289 = vadd.f32 %v287, 1.0
    %v290 = vrcp.pop %v288
    %v291 = vmul.f32 %v288, %v290
    %v292 = vsub.f32 1.0, %v291
    %v293 = vmul.f32 %v290, %v292
    %v294 = vadd.f32 %v290, %v293
    %vm295 = vweird.f32 %v288
    %vm296 = vweird.f32 %v290
    %vm297 = vmor %vm295, %vm296
    %v298 = vsel %vm297, %v290, %v294
    %v299 = vand.u32 2147483647, %v288
    %vm300 = vcmp.eq.f32.partialorder %v299, 8.507059e+37
    %v301 = vand.u32 %v288, 2147483648
    %v302 = vor.u32 1.1754944e-38, %v301
    %v303 = vsel %vm300, %v302, %v298
    %v304 = vmul.f32 1.0, %v303
    %v305 = vrcp.pop %v289
    %v306 = vmul.f32 %v289, %v305
    %v307 = vsub.f32 1.0, %v306
    %v308 = vmul.f32 %v305, %v307
    %v309 = vadd.f32 %v305, %v308
    %vm310 = vweird.f32 %v289
    %vm311 = vweird.f32 %v305
    %vm312 = vmor %vm310, %vm311
    %v313 = vsel %vm312, %v305, %v309
    %v314 = vand.u32 2147483647, %v289
    %vm315 = vcmp.eq.f32.partialorder %v314, 8.507059e+37
    %v316 = vand.u32 %v289, 2147483648
    %v317 = vor.u32 1.1754944e-38, %v316
    %v318 = vsel %vm315, %v317, %v313
    %v319 = vmul.f32 1.0, %v318
    %v320 = vmul.f32 %v280, %v304
    %v321 = vmul.f32 %v281, %v319
    %v322 = vadd.f32 %v194, %v320
    %v323 = vadd.f32 %v195, %v321
    %s324 = scalar_lea.vmem %s5, 8
    %v325 = vld [vmem:[%s324] sm:$0xff]
    %s326 = scalar_lea.vmem %s2, 8
    %v327 = vld [vmem:[%s326] sm:$0xff]
    %s328 = scalar_lea.vmem %s3, 8
    %v329 = vld [vmem:[%s328] sm:$0xff]
    %s330 = scalar_lea.vmem %s4, 32
    %v331 = vld [vmem:[%s330] sm:$0xff]
    %v332 = vld [vmem:[%s330 + $0x8] sm:$0xff]
    %v333 = vld [vmem:[%s330 + $0x10] sm:$0xff]
    %v334 = vld [vmem:[%s330 + $0x18] sm:$0xff]
    %v335 = vadd.f32 %v322, %v37
    %v336 = vadd.f32 %v323, %v38
    %v337 = vsel %vm43, %v335, 0.0
    %338 = vadd.xlane.f32.xlu0 %v337
    %v339 = vpop.xlane.xlu0 %338
    %v340 = vsel %vm43, %v336, 0.0
    %341 = vadd.xlane.f32.xlu0 %v340
    %v342 = vpop.xlane.xlu0 %341
    %v343 = vmul.f32 %v339, %v56
    %v344 = vmul.f32 %v342, %v56
    %v345 = vmul.f32 %v335, %v335
    %v346 = vmul.f32 %v336, %v336
    %v347 = vsel %vm43, %v345, 0.0
    %348 = vadd.xlane.f32.xlu0 %v347
    %v349 = vpop.xlane.xlu0 %348
    %v350 = vsel %vm43, %v346, 0.0
    %351 = vadd.xlane.f32.xlu0 %v350
    %v352 = vpop.xlane.xlu0 %351
    %v353 = vmul.f32 %v349, %v56
    %v354 = vmul.f32 %v352, %v56
    %v355 = vmul.f32 %v343, %v343
    %v356 = vmul.f32 %v344, %v344
    %v357 = vsub.f32 %v353, %v355
    %v358 = vsub.f32 %v354, %v356
    %v359 = vsub.f32 %v335, %v343
    %v360 = vsub.f32 %v336, %v344
    %v361 = vadd.f32 %v357, 1e-05
    %v362 = vadd.f32 %v358, 1e-05
    %v363 = vrsqrt.pop %v361
    %v364 = vmul.f32 %v363, %v361
    %v365 = vmul.f32 %v364, %v363
    %v366 = vmul.f32 0.5, %v365
    %v367 = vsub.f32 1.5, %v366
    %v368 = vmul.f32 %v363, %v367
    %vm369 = vweird.f32 %v361
    %vm370 = vweird.f32 %v363
    %vm371 = vmor %vm369, %vm370
    %v372 = vsel %vm371, %v363, %v368
    %v373 = vrsqrt.pop %v362
    %v374 = vmul.f32 %v373, %v362
    %v375 = vmul.f32 %v374, %v373
    %v376 = vmul.f32 0.5, %v375
    %v377 = vsub.f32 1.5, %v376
    %v378 = vmul.f32 %v373, %v377
    %vm379 = vweird.f32 %v362
    %vm380 = vweird.f32 %v373
    %vm381 = vmor %vm379, %vm380
    %v382 = vsel %vm381, %v373, %v378
    %v383 = vmul.f32 %v359, %v372
    %v384 = vmul.f32 %v360, %v382
    %v385 = vperm.slane %v325, 0
    %v386 = vmul.f32 %v383, %v385
    %v387 = vmul.f32 %v384, %v385
    %v388 = vperm.slane %v325, 1
    %v389 = vadd.f32 %v386, %v388
    %v390 = vadd.f32 %v387, %v388
    %392 = vset.pattern.permute.xlu0 0
    %393 = vperm.xlu0 %392, %v329
    %v394 = vpop.permute.xlu0 %393
    %v397 = vsel %vm110, %v327, 0
    %399 = vmatpush.msra.mxu0 0.0
    %400 = vmatpush.msra.mxu0 0.0
    %401 = vmatpush.msra.mxu0 0.0
    %402 = vmatpush.msra.mxu0 0.0
    %403 = vmatpush.msra.mxu0 0.0
    %404 = vmatpush.msra.mxu0 0.0
    %405 = vmatpush.msra.mxu0 0.0
    %406 = vmatpush.msra.mxu0 0.0
    %407 = vmatpush.msra.mxu0 0.0
    %408 = vmatpush.msra.mxu0 0.0
    %409 = vmatpush.msra.mxu0 0.0
    %410 = vmatpush.msra.mxu0 0.0
    %411 = vmatpush.msra.mxu0 0.0
    %412 = vmatpush.msra.mxu0 0.0
    %413 = vmatpush.msra.mxu0 0.0
    %414 = vmatpush.msra.mxu0 %v389
    %415 = vmatmul.f32.gmra.mxu0 %v397
    %v416 = vpop.f32.mrf.mxu0
    %v417 = vadd.f32 %v394, %v416
    %418 = vdwg.mxu0
    %419 = vmatpush.msra.mxu0 0.0
    %420 = vmatpush.msra.mxu0 0.0
    %421 = vmatpush.msra.mxu0 0.0
    %422 = vmatpush.msra.mxu0 0.0
    %423 = vmatpush.msra.mxu0 0.0
    %424 = vmatpush.msra.mxu0 0.0
    %425 = vmatpush.msra.mxu0 0.0
    %426 = vmatpush.msra.mxu0 0.0
    %427 = vmatpush.msra.mxu0 0.0
    %428 = vmatpush.msra.mxu0 0.0
    %429 = vmatpush.msra.mxu0 0.0
    %430 = vmatpush.msra.mxu0 0.0
    %431 = vmatpush.msra.mxu0 0.0
    %432 = vmatpush.msra.mxu0 0.0
    %433 = vmatpush.msra.mxu0 0.0
    %434 = vmatpush.msra.mxu0 %v390
    %435 = vmatmul.f32.gmra.mxu0 %v397
    %v436 = vpop.f32.mrf.mxu0
    %v437 = vadd.f32 %v394, %v436
    %438 = vdwg.mxu0
    %v439 = vxor.u32 %v417, 2147483648
    %v440 = vxor.u32 %v437, 2147483648
    %v441 = vmul.f32 %v439, 1.442695
    %v442 = vpow.pop %v441
    %v443 = vmul.f32 %v440, 1.442695
    %v444 = vpow.pop %v443
    %v445 = vadd.f32 %v442, 1.0
    %v446 = vadd.f32 %v444, 1.0
    %v447 = vrcp.pop %v445
    %v448 = vmul.f32 %v445, %v447
    %v449 = vsub.f32 1.0, %v448
    %v450 = vmul.f32 %v447, %v449
    %v451 = vadd.f32 %v447, %v450
    %vm452 = vweird.f32 %v445
    %vm453 = vweird.f32 %v447
    %vm454 = vmor %vm452, %vm453
    %v455 = vsel %vm454, %v447, %v451
    %v456 = vand.u32 2147483647, %v445
    %vm457 = vcmp.eq.f32.partialorder %v456, 8.507059e+37
    %v458 = vand.u32 %v445, 2147483648
    %v459 = vor.u32 1.1754944e-38, %v458
    %v460 = vsel %vm457, %v459, %v455
    %v461 = vmul.f32 1.0, %v460
    %v462 = vrcp.pop %v446
    %v463 = vmul.f32 %v446, %v462
    %v464 = vsub.f32 1.0, %v463
    %v465 = vmul.f32 %v462, %v464
    %v466 = vadd.f32 %v462, %v465
    %vm467 = vweird.f32 %v446
    %vm468 = vweird.f32 %v462
    %vm469 = vmor %vm467, %vm468
    %v470 = vsel %vm469, %v462, %v466
    %v471 = vand.u32 2147483647, %v446
    %vm472 = vcmp.eq.f32.partialorder %v471, 8.507059e+37
    %v473 = vand.u32 %v446, 2147483648
    %v474 = vor.u32 1.1754944e-38, %v473
    %v475 = vsel %vm472, %v474, %v470
    %v476 = vmul.f32 1.0, %v475
    %v477 = vmul.f32 %v417, %v461
    %v478 = vmul.f32 %v437, %v476
    %v479 = vadd.f32 %v335, %v477
    %v480 = vadd.f32 %v336, %v478
    %v481 = vsel %vm43, %v479, 0.0
    %482 = vadd.xlane.f32.xlu0 %v481
    %v483 = vpop.xlane.xlu0 %482
    %v484 = vsel %vm43, %v480, 0.0
    %485 = vadd.xlane.f32.xlu0 %v484
    %v486 = vpop.xlane.xlu0 %485
    %v487 = vmul.f32 %v483, %v56
    %v488 = vmul.f32 %v486, %v56
    %v489 = vmul.f32 %v479, %v479
    %v490 = vmul.f32 %v480, %v480
    %v491 = vsel %vm43, %v489, 0.0
    %492 = vadd.xlane.f32.xlu0 %v491
    %v493 = vpop.xlane.xlu0 %492
    %v494 = vsel %vm43, %v490, 0.0
    %495 = vadd.xlane.f32.xlu0 %v494
    %v496 = vpop.xlane.xlu0 %495
    %v497 = vmul.f32 %v493, %v56
    %v498 = vmul.f32 %v496, %v56
    %v499 = vmul.f32 %v487, %v487
    %v500 = vmul.f32 %v488, %v488
    %v501 = vsub.f32 %v497, %v499
    %v502 = vsub.f32 %v498, %v500
    %v503 = vsub.f32 %v479, %v487
    %v504 = vsub.f32 %v480, %v488
    %v505 = vadd.f32 %v501, 1e-05
    %v506 = vadd.f32 %v502, 1e-05
    %v507 = vrsqrt.pop %v505
    %v508 = vmul.f32 %v507, %v505
    %v509 = vmul.f32 %v508, %v507
    %v510 = vmul.f32 0.5, %v509
    %v511 = vsub.f32 1.5, %v510
    %v512 = vmul.f32 %v507, %v511
    %vm513 = vweird.f32 %v505
    %vm514 = vweird.f32 %v507
    %vm515 = vmor %vm513, %vm514
    %v516 = vsel %vm515, %v507, %v512
    %v517 = vrsqrt.pop %v506
    %v518 = vmul.f32 %v517, %v506
    %v519 = vmul.f32 %v518, %v517
    %v520 = vmul.f32 0.5, %v519
    %v521 = vsub.f32 1.5, %v520
    %v522 = vmul.f32 %v517, %v521
    %vm523 = vweird.f32 %v506
    %vm524 = vweird.f32 %v517
    %vm525 = vmor %vm523, %vm524
    %v526 = vsel %vm525, %v517, %v522
    %v527 = vmul.f32 %v503, %v516
    %v528 = vmul.f32 %v504, %v526
    %v529 = vperm.slane %v325, 2
    %v530 = vmul.f32 %v527, %v529
    %v531 = vmul.f32 %v528, %v529
    %v532 = vperm.slane %v325, 3
    %v533 = vadd.f32 %v530, %v532
    %v534 = vadd.f32 %v531, %v532
    %v536 = vsel %vm43, %v533, 0
    %v539 = vsel %vm43, %v534, 0
    %541 = vmatpush.msra.mxu0 0.0
    %542 = vmatpush.msra.mxu0 0.0
    %543 = vmatpush.msra.mxu0 0.0
    %544 = vmatpush.msra.mxu0 0.0
    %545 = vmatpush.msra.mxu0 0.0
    %546 = vmatpush.msra.mxu0 0.0
    %547 = vmatpush.msra.mxu0 0.0
    %548 = vmatpush.msra.mxu0 0.0
    %549 = vmatpush.msra.mxu0 0.0
    %550 = vmatpush.msra.mxu0 0.0
    %551 = vmatpush.msra.mxu0 0.0
    %552 = vmatpush.msra.mxu0 0.0
    %553 = vmatpush.msra.mxu0 %v334
    %554 = vmatpush.msra.mxu0 %v333
    %555 = vmatpush.msra.mxu0 %v332
    %556 = vmatpush.msra.mxu0 %v331
    %557 = vmatmul.f32.gmra.mxu0 %v536
    %v558 = vpop.f32.mrf.mxu0
    %v559 = vadd.f32 0.0, %v558
    %560 = vmatmul.f32.gmra.mxu0 %v539
    %v561 = vpop.f32.mrf.mxu0
    %v562 = vadd.f32 0.0, %v561
    %563 = vdwg.mxu0
    %v564 = vperm.slane %v325, 4
    %v565 = vadd.f32 %v559, %v564
    %v566 = vadd.f32 %v562, %v564
    %v567 = vxor.u32 %v565, 2147483648
    %v568 = vxor.u32 %v566, 2147483648
    %v569 = vmul.f32 %v567, 1.442695
    %v570 = vpow.pop %v569
    %v571 = vmul.f32 %v568, 1.442695
    %v572 = vpow.pop %v571
    %v573 = vadd.f32 %v570, 1.0
    %v574 = vadd.f32 %v572, 1.0
    %v575 = vrcp.pop %v573
    %v576 = vmul.f32 %v573, %v575
    %v577 = vsub.f32 1.0, %v576
    %v578 = vmul.f32 %v575, %v577
    %v579 = vadd.f32 %v575, %v578
    %vm580 = vweird.f32 %v573
    %vm581 = vweird.f32 %v575
    %vm582 = vmor %vm580, %vm581
    %v583 = vsel %vm582, %v575, %v579
    %v584 = vand.u32 2147483647, %v573
    %vm585 = vcmp.eq.f32.partialorder %v584, 8.507059e+37
    %v586 = vand.u32 %v573, 2147483648
    %v587 = vor.u32 1.1754944e-38, %v586
    %v588 = vsel %vm585, %v587, %v583
    %v589 = vmul.f32 1.0, %v588
    %v590 = vrcp.pop %v574
    %v591 = vmul.f32 %v574, %v590
    %v592 = vsub.f32 1.0, %v591
    %v593 = vmul.f32 %v590, %v592
    %v594 = vadd.f32 %v590, %v593
    %vm595 = vweird.f32 %v574
    %vm596 = vweird.f32 %v590
    %vm597 = vmor %vm595, %vm596
    %v598 = vsel %vm597, %v590, %v594
    %v599 = vand.u32 2147483647, %v574
    %vm600 = vcmp.eq.f32.partialorder %v599, 8.507059e+37
    %v601 = vand.u32 %v574, 2147483648
    %v602 = vor.u32 1.1754944e-38, %v601
    %v603 = vsel %vm600, %v602, %v598
    %v604 = vmul.f32 1.0, %v603
    %v605 = vmul.f32 %v565, %v589
    %v606 = vmul.f32 %v566, %v604
    %v607 = vadd.f32 %v479, %v605
    %v608 = vadd.f32 %v480, %v606
    %609 = vst.msk [vmem:[#allocation2] sm:$0xff] %vm43, %v607
    %610 = vst.msk [vmem:[#allocation2 + $0x8] sm:$0xff] %vm43, %v608
    // Predicated region
    $region26: #{trans_mlp_forward.1} parent=1 // pred_check
      _
    $region27: #{trans_mlp_forward.1} parent=1 // pred_check_branch
      %612 = sbr.rel (0) target = $region29
    $region28: #{trans_mlp_forward.1} parent=1 // pred_region
      %614 = vsyncadd [#allocation3], 0
      %s615 = sshll.u32 [#allocation2], 4
      %s616 = int_to_ptr.vmem [resolvable:$true] %s615
      %s617 = sshll.u32 %s6, 4
      %s618 = int_to_ptr.hbm [resolvable:$true] %s617
      %623 = dma.vmem_to_hbm [thread:$0]  %s616, 256, %s618, [#allocation3], 128, 128, 8
    $region29: #{trans_mlp_forward.1} parent=1 // pred_fallthru
      _
    // Predicated region
    $region30: #{trans_mlp_forward.1} parent=1 // pred_check
      _
    $region31: #{trans_mlp_forward.1} parent=1 // pred_check_branch
      %625 = sbr.rel (0) target = $region33
    $region32: #{trans_mlp_forward.1} parent=1 // pred_region
      %627 = dma.done [#allocation3], 256
    $region33: #{trans_mlp_forward.1} parent=1 // pred_fallthru
      _
    %628 = vsyncpa [#allocation3], 1

</llo_original>
